<compile_context>
chip_gen: v6e
topology: v6e:2x2x1
jax: 0.10.0
libtpu: 0.0.40
codegen_flags: <defaults>
</compile_context>

<pallas_src>
import jax
import jax.numpy as jnp
from jax import lax
from jax.experimental import pallas as pl
from jax.experimental.pallas import tpu as pltpu

# ----------------------------------------------------------------------------
# Model configuration.
# ----------------------------------------------------------------------------
IN_FEATURES = 16   # assumed len(dataset.input_columns)
HIDDEN1 = 64
HIDDEN2 = 32

# (name, out_dim) in the order they are concatenated along the fused head axis.
HEADS = (
    ("rating", 1),
    ("review_count", 1),
    ("weight", 1),
    ("price", 1),
    ("brand", 2),
    ("size", 2),
    ("color", 4),
    ("material", 3),
    ("category", 4),
)
TOTAL_HEAD_DIM = sum(d for _, d in HEADS)   # 19
HEAD_DIM_PADDED = 24                        # sublane-full (multiple of 8)

DEFAULT_TILE_B = 8192   # rows per grid step (multiple of 128); sweep 8192-16384


def _round_up(n, m):
    return ((n + m - 1) // m) * m


# ----------------------------------------------------------------------------
# Pallas kernel: shared MLP (Linear+ReLU, Linear+ReLU) + fused 9-head matmul.
# Input block is batch-major (TILE_B, IN); intermediates/output are
# feature-major (features, TILE_B) so stores stay lane-dense.
# ----------------------------------------------------------------------------
def mtl_kernel(x_ref, w1_ref, b1_ref, w2_ref, b2_ref, wh_ref, bh_ref, ot_ref):
    # Layer 1: h1^T = relu(W1 @ x^T + b1).  Contract both operands' feature
    # axes (no wrapper-side transpose of x needed).
    h1 = lax.dot_general(
        w1_ref[...], x_ref[...],
        dimension_numbers=(((1,), (1,)), ((), ())),
        preferred_element_type=jnp.float32,
    ) + b1_ref[...]                                             # (H1, TILE_B) f32
    h1 = jnp.maximum(h1, 0.0).astype(jnp.bfloat16)              # bf16 round-trip

    # Layer 2: h2^T = relu(W2 @ h1^T + b2)   (bf16 operands, f32 accumulation)
    h2 = jnp.dot(w2_ref[...], h1, preferred_element_type=jnp.float32) + b2_ref[...]
    h2 = jnp.maximum(h2, 0.0).astype(jnp.bfloat16)              # (H2, TILE_B)

    # All 9 heads fused (padded to 24 rows): (24, 32) @ (32, TILE_B)
    ot_ref[...] = (
        jnp.dot(wh_ref[...], h2, preferred_element_type=jnp.float32) + bh_ref[...]
    )


def multi_task_forward(x, params, tile_b=DEFAULT_TILE_B):
    """x: (B, IN_FEATURES) f32. Returns dict of per-task outputs (PyTorch layout)."""
    B, F = x.shape
    assert F == IN_FEATURES, (F, IN_FEATURES)

    w1, b1 = params["w1"], params["b1"]
    b2 = params["b2"]
    w2 = params["w2"].astype(jnp.bfloat16)

    # Pad fused head weights 19 -> 24 rows (zero rows are sliced off later).
    wh = (
        jnp.zeros((HEAD_DIM_PADDED, HIDDEN2), jnp.float32)
        .at[:TOTAL_HEAD_DIM].set(params["wh"])
        .astype(jnp.bfloat16)
    )
    bh = (
        jnp.zeros((HEAD_DIM_PADDED, 1), jnp.float32)
        .at[:TOTAL_HEAD_DIM].set(params["bh"])
    )

    # Pad batch to a lane-aligned multiple of the tile.  No transpose of x.
    bp = _round_up(max(B, 1), 128)
    tile_b = min(tile_b, bp)
    bp = _round_up(bp, tile_b)
    xp = jnp.pad(x, ((0, bp - B), (0, 0)))                      # (bp, IN), batch-major

    grid = (bp // tile_b,)

    weight_bytes = (
        4 * (HIDDEN1 * IN_FEATURES + HIDDEN1 + HIDDEN2 + HEAD_DIM_PADDED)
        + 2 * (HIDDEN2 * HIDDEN1 + HEAD_DIM_PADDED * HIDDEN2)
    )
    cost = pl.CostEstimate(
        flops=2 * bp * (IN_FEATURES * HIDDEN1
                        + HIDDEN1 * HIDDEN2
                        + HIDDEN2 * HEAD_DIM_PADDED),
        transcendentals=0,
        bytes_accessed=4 * bp * (IN_FEATURES + HEAD_DIM_PADDED) + weight_bytes,
    )

    out_t = pl.pallas_call(
        mtl_kernel,
        out_shape=jax.ShapeDtypeStruct((HEAD_DIM_PADDED, bp), jnp.float32),
        grid=grid,
        in_specs=[
            # batch-tiled input, batch-major (double-buffered by the pipeline)
            pl.BlockSpec((tile_b, IN_FEATURES), lambda i: (i, 0)),
            # weights / biases: constant index_map -> resident across the grid
            pl.BlockSpec((HIDDEN1, IN_FEATURES), lambda i: (0, 0)),
            pl.BlockSpec((HIDDEN1, 1), lambda i: (0, 0)),
            pl.BlockSpec((HIDDEN2, HIDDEN1), lambda i: (0, 0)),
            pl.BlockSpec((HIDDEN2, 1), lambda i: (0, 0)),
            pl.BlockSpec((HEAD_DIM_PADDED, HIDDEN2), lambda i: (0, 0)),
            pl.BlockSpec((HEAD_DIM_PADDED, 1), lambda i: (0, 0)),
        ],
        # lane-dense feature-major output tile
        out_specs=pl.BlockSpec((HEAD_DIM_PADDED, tile_b), lambda i: (0, i)),
        compiler_params=pltpu.CompilerParams(
            dimension_semantics=("parallel",),      # megacore sharding on v7x
            vmem_limit_bytes=32 * 1024 * 1024,      # covers v5e's 16 MiB default
        ),
        cost_estimate=cost,
    )(xp, w1, b1, w2, b2, wh, bh)

    # Back to PyTorch (batch, features) layout; drop pad rows and split per task.
    out = out_t[:TOTAL_HEAD_DIM, :B].T                           # (B, 19)
    results = {}
    off = 0
    for name, dim in HEADS:
        results[name] = out[:, off:off + dim]
        off += dim
    return results


# ----------------------------------------------------------------------------
# Deterministic parameter init (PyTorch nn.Linear-style uniform bounds),
# stored in the kernel's (out, in) / (out, 1) layout, f32.
# ----------------------------------------------------------------------------
def init_params(key):
    def linear(key, fan_in, fan_out):
        kw, kb = jax.random.split(key)
        bound = 1.0 / jnp.sqrt(jnp.float32(fan_in))
        w = jax.random.uniform(kw, (fan_out, fan_in), jnp.float32, -bound, bound)
        b = jax.random.uniform(kb, (fan_out, 1), jnp.float32, -bound, bound)
        return w, b

    keys = jax.random.split(key, 2 + len(HEADS))
    w1, b1 = linear(keys[0], IN_FEATURES, HIDDEN1)   # (64, 16), (64, 1)
    w2, b2 = linear(keys[1], HIDDEN1, HIDDEN2)       # (32, 64), (32, 1)

    head_ws, head_bs = [], []
    for k, (_, dim) in zip(keys[2:], HEADS):
        w, b = linear(k, HIDDEN2, dim)
        head_ws.append(w)
        head_bs.append(b)
    wh = jnp.concatenate(head_ws, axis=0)            # (19, 32)
    bh = jnp.concatenate(head_bs, axis=0)            # (19, 1)

    return {"w1": w1, "b1": b1, "w2": w2, "b2": b2, "wh": wh, "bh": bh}


# ----------------------------------------------------------------------------
# Pure-JAX references for correctness checks.
# ----------------------------------------------------------------------------
def _split_heads(out):
    results, off = {}, 0
    for name, dim in HEADS:
        results[name] = out[:, off:off + dim]
        off += dim
    return results


def reference_forward_f32(x, params):
    h1 = jnp.maximum(x @ params["w1"].T + params["b1"].T, 0.0)
    h2 = jnp.maximum(h1 @ params["w2"].T + params["b2"].T, 0.0)
    out = h2 @ params["wh"].T + params["bh"].T
    return _split_heads(out)


def reference_forward_bf16(x, params):
    """Mirrors the kernel's bf16 rounding points (f32 accumulation)."""
    h1 = jnp.maximum(x @ params["w1"].T + params["b1"].T, 0.0).astype(jnp.bfloat16)
    w2 = params["w2"].astype(jnp.bfloat16)
    h2 = jnp.maximum(
        jnp.dot(h1, w2.T, preferred_element_type=jnp.float32) + params["b2"].T, 0.0
    ).astype(jnp.bfloat16)
    wh = params["wh"].astype(jnp.bfloat16)
    out = jnp.dot(h2, wh.T, preferred_element_type=jnp.float32) + params["bh"].T
    return _split_heads(out)


if __name__ == "__main__":
    key = jax.random.PRNGKey(0)
    pkey, xkey = jax.random.split(key)

    params = init_params(pkey)
    batch = 8
    x = jax.random.normal(xkey, (batch, IN_FEATURES), jnp.float32)

    outputs = jax.jit(multi_task_forward)(x, params)
    outputs = jax.block_until_ready(outputs)

    ref_bf16 = reference_forward_bf16(x, params)   # matches kernel rounding points
    ref_f32 = reference_forward_f32(x, params)     # pure f32 sanity check

    for name, dim in HEADS:
        assert outputs[name].shape == (batch, dim), (name, outputs[name].shape)
        assert jnp.allclose(outputs[name], ref_bf16[name], atol=2e-3, rtol=2e-3), name
        assert jnp.allclose(outputs[name], ref_f32[name], atol=5e-2, rtol=5e-2), name

    print("KERNEL_OK")
</pallas_src>

<mosaic_0001>
module attributes {stable_mosaic.version = 11 : i64} {
  func.func @mtl_kernel(%arg0: i32, %arg1: memref<128x16xf32, #tpu.memory_space<vmem>>, %arg2: memref<64x16xf32, #tpu.memory_space<vmem>>, %arg3: memref<64x1xf32, #tpu.memory_space<vmem>>, %arg4: memref<32x64xbf16, #tpu.memory_space<vmem>>, %arg5: memref<32x1xf32, #tpu.memory_space<vmem>>, %arg6: memref<24x32xbf16, #tpu.memory_space<vmem>>, %arg7: memref<24x1xf32, #tpu.memory_space<vmem>>, %arg8: memref<24x128xf32, #tpu.memory_space<vmem>>) attributes {dimension_semantics = [#tpu.dimension_semantics<parallel>], iteration_bounds = array<i64: 1>, scalar_prefetch = 0 : i64, scratch_operands = 0 : i64, tpu.core_type = #tpu.core_type<tc>, window_params = [{transform_indices = @transform_0, window_bounds = array<i64: 128, 16>}, {pipeline_mode = #tpu.pipeline_mode<synchronous>, transform_indices = @transform_1, window_bounds = array<i64: 64, 16>}, {pipeline_mode = #tpu.pipeline_mode<synchronous>, transform_indices = @transform_2, window_bounds = array<i64: 64, 1>}, {pipeline_mode = #tpu.pipeline_mode<synchronous>, transform_indices = @transform_3, window_bounds = array<i64: 32, 64>}, {pipeline_mode = #tpu.pipeline_mode<synchronous>, transform_indices = @transform_4, window_bounds = array<i64: 32, 1>}, {pipeline_mode = #tpu.pipeline_mode<synchronous>, transform_indices = @transform_5, window_bounds = array<i64: 24, 32>}, {pipeline_mode = #tpu.pipeline_mode<synchronous>, transform_indices = @transform_6, window_bounds = array<i64: 24, 1>}, {transform_indices = @transform_7, window_bounds = array<i64: 24, 128>}]} {
    %c0 = arith.constant 0 : index
    %c0_0 = arith.constant 0 : index
    %0 = vector.load %arg2[%c0, %c0_0] : memref<64x16xf32, #tpu.memory_space<vmem>>, vector<64x16xf32>
    %c0_1 = arith.constant 0 : index
    %c0_2 = arith.constant 0 : index
    %1 = vector.load %arg1[%c0_1, %c0_2] : memref<128x16xf32, #tpu.memory_space<vmem>>, vector<128x16xf32>
    %cst = arith.constant dense<0.000000e+00> : vector<64x128xf32>
    %2 = tpu.matmul %0, %1, %cst {dimension_numbers = #tpu.dot_dimension_numbers<[1], [1], [0], [0], [0, 0, 1, 0], [], []>} : vector<64x16xf32>, vector<128x16xf32>, vector<64x128xf32> -> vector<64x128xf32>
    %c0_3 = arith.constant 0 : index
    %c0_4 = arith.constant 0 : index
    %3 = vector.load %arg3[%c0_3, %c0_4] : memref<64x1xf32, #tpu.memory_space<vmem>>, vector<64x1xf32>
    %4 = vector.broadcast %3 : vector<64x1xf32> to vector<64x128xf32>
    %5 = arith.addf %2, %4 : vector<64x128xf32>
    %cst_5 = arith.constant 0.000000e+00 : f32
    %6 = vector.broadcast %cst_5 : f32 to vector<64x128xf32>
    %7 = arith.maximumf %5, %6 : vector<64x128xf32>
    %8 = arith.truncf %7 : vector<64x128xf32> to vector<64x128xbf16>
    %c0_6 = arith.constant 0 : index
    %c0_7 = arith.constant 0 : index
    %9 = vector.load %arg4[%c0_6, %c0_7] : memref<32x64xbf16, #tpu.memory_space<vmem>>, vector<32x64xbf16>
    %cst_8 = arith.constant dense<0.000000e+00> : vector<32x128xf32>
    %10 = tpu.matmul %9, %8, %cst_8 {dimension_numbers = #tpu.dot_dimension_numbers<[1], [0], [0], [1], [0, 0, 1, 1], [], []>} : vector<32x64xbf16>, vector<64x128xbf16>, vector<32x128xf32> -> vector<32x128xf32>
    %c0_9 = arith.constant 0 : index
    %c0_10 = arith.constant 0 : index
    %11 = vector.load %arg5[%c0_9, %c0_10] : memref<32x1xf32, #tpu.memory_space<vmem>>, vector<32x1xf32>
    %12 = vector.broadcast %11 : vector<32x1xf32> to vector<32x128xf32>
    %13 = arith.addf %10, %12 : vector<32x128xf32>
    %cst_11 = arith.constant 0.000000e+00 : f32
    %14 = vector.broadcast %cst_11 : f32 to vector<32x128xf32>
    %15 = arith.maximumf %13, %14 : vector<32x128xf32>
    %16 = arith.truncf %15 : vector<32x128xf32> to vector<32x128xbf16>
    %c0_12 = arith.constant 0 : index
    %c0_13 = arith.constant 0 : index
    %17 = vector.load %arg6[%c0_12, %c0_13] : memref<24x32xbf16, #tpu.memory_space<vmem>>, vector<24x32xbf16>
    %cst_14 = arith.constant dense<0.000000e+00> : vector<24x128xf32>
    %18 = tpu.matmul %17, %16, %cst_14 {dimension_numbers = #tpu.dot_dimension_numbers<[1], [0], [0], [1], [0, 0, 1, 1], [], []>} : vector<24x32xbf16>, vector<32x128xbf16>, vector<24x128xf32> -> vector<24x128xf32>
    %c0_15 = arith.constant 0 : index
    %c0_16 = arith.constant 0 : index
    %19 = vector.load %arg7[%c0_15, %c0_16] : memref<24x1xf32, #tpu.memory_space<vmem>>, vector<24x1xf32>
    %20 = vector.broadcast %19 : vector<24x1xf32> to vector<24x128xf32>
    %21 = arith.addf %18, %20 : vector<24x128xf32>
    %c0_17 = arith.constant 0 : index
    %c0_18 = arith.constant 0 : index
    %22 = vector.load %arg8[%c0_17, %c0_18] : memref<24x128xf32, #tpu.memory_space<vmem>>, vector<24x128xf32>
    tpu.vector_store %arg8[%c0_17, %c0_18], %21 {strides = array<i32>} : memref<24x128xf32, #tpu.memory_space<vmem>>, vector<24x128xf32>,
    return
  }
  func.func @transform_0(%arg0: i32) -> (i32, i32) {
    %c0_i32 = arith.constant 0 : i32
    %c0_i32_0 = arith.constant 0 : i32
    return %arg0, %c0_i32 : i32, i32
  }
  func.func @transform_1(%arg0: i32) -> (i32, i32) {
    %c0_i32 = arith.constant 0 : i32
    %c0_i32_0 = arith.constant 0 : i32
    %c0_i32_1 = arith.constant 0 : i32
    return %c0_i32, %c0_i32_0 : i32, i32
  }
  func.func @transform_2(%arg0: i32) -> (i32, i32) {
    %c0_i32 = arith.constant 0 : i32
    %c0_i32_0 = arith.constant 0 : i32
    %c0_i32_1 = arith.constant 0 : i32
    return %c0_i32, %c0_i32_0 : i32, i32
  }
  func.func @transform_3(%arg0: i32) -> (i32, i32) {
    %c0_i32 = arith.constant 0 : i32
    %c0_i32_0 = arith.constant 0 : i32
    %c0_i32_1 = arith.constant 0 : i32
    return %c0_i32, %c0_i32_0 : i32, i32
  }
  func.func @transform_4(%arg0: i32) -> (i32, i32) {
    %c0_i32 = arith.constant 0 : i32
    %c0_i32_0 = arith.constant 0 : i32
    %c0_i32_1 = arith.constant 0 : i32
    return %c0_i32, %c0_i32_0 : i32, i32
  }
  func.func @transform_5(%arg0: i32) -> (i32, i32) {
    %c0_i32 = arith.constant 0 : i32
    %c0_i32_0 = arith.constant 0 : i32
    %c0_i32_1 = arith.constant 0 : i32
    return %c0_i32, %c0_i32_0 : i32, i32
  }
  func.func @transform_6(%arg0: i32) -> (i32, i32) {
    %c0_i32 = arith.constant 0 : i32
    %c0_i32_0 = arith.constant 0 : i32
    %c0_i32_1 = arith.constant 0 : i32
    return %c0_i32, %c0_i32_0 : i32, i32
  }
  func.func @transform_7(%arg0: i32) -> (i32, i32) {
    %c0_i32 = arith.constant 0 : i32
    %c0_i32_0 = arith.constant 0 : i32
    return %c0_i32, %arg0 : i32, i32
  }
}

</mosaic_0001>

<llo_original>
// kernel: multi_task_forward.1
$region0: #{multi_task_forward.1}
  #allocation0 [shape = 'u32[]', space=smem, size = 0x4, offset = 0x4, fixed_abs, tag = 'smem constant byte address 0x4 - core index']
  #allocation1 [shape = 'u32[144,128]{1,0:T(1,128)}', space=vmem, size = 0x12000, scoped, tag = 'internal scratch']
  %s0 = inlined_call_operand.vmem [shape: f32[128,16], index: 0, kind: input, shape index: {}]
  %s1 = inlined_call_operand.vmem [shape: f32[64,16], index: 1, kind: input, shape index: {}]
  %s2 = inlined_call_operand.vmem [shape: f32[64,1], index: 2, kind: input, shape index: {}]
  %s3 = inlined_call_operand.vmem [shape: bf16[32,64], index: 3, kind: input, shape index: {}]
  %s4 = inlined_call_operand.vmem [shape: f32[32,1], index: 4, kind: input, shape index: {}]
  %s5 = inlined_call_operand.vmem [shape: bf16[24,32], index: 5, kind: input, shape index: {}]
  %s6 = inlined_call_operand.vmem [shape: f32[24,1], index: 6, kind: input, shape index: {}]
  %s7 = inlined_call_operand.vmem [shape: f32[24,128], index: 7, kind: output, shape index: {}]
  %s8 = sld [smem:[#allocation0]]
  $region38: #{multi_task_forward.1} parent=0
    _
  %s10 = ssub.s32 1, %s8
  %s11 = scalar_select 0, %s10, %s8
  // Predicated region
  $region2: #{multi_task_forward.1} parent=0 // pred_check
    _
  $region3: #{multi_task_forward.1} parent=0 // pred_check_branch
    %13 = sbr.rel (0) target = $region5
  $region4: #{multi_task_forward.1} parent=0 // pred_region
    _
  $region5: #{multi_task_forward.1} parent=0 // pred_fallthru
    _
  // Predicated region
  $region6: #{multi_task_forward.1} parent=0 // pred_check
    _
  $region7: #{multi_task_forward.1} parent=0 // pred_check_branch
    %15 = sbr.rel (0) target = $region9
  $region8: #{multi_task_forward.1} parent=0 // pred_region
    _
  $region9: #{multi_task_forward.1} parent=0 // pred_fallthru
    _
  // Predicated region
  $region10: #{multi_task_forward.1} parent=0 // pred_check
    _
  $region11: #{multi_task_forward.1} parent=0 // pred_check_branch
    %17 = sbr.rel (0) target = $region13
  $region12: #{multi_task_forward.1} parent=0 // pred_region
    _
  $region13: #{multi_task_forward.1} parent=0 // pred_fallthru
    _
  // Predicated region
  $region14: #{multi_task_forward.1} parent=0 // pred_check
    _
  $region15: #{multi_task_forward.1} parent=0 // pred_check_branch
    %19 = sbr.rel (0) target = $region17
  $region16: #{multi_task_forward.1} parent=0 // pred_region
    _
  $region17: #{multi_task_forward.1} parent=0 // pred_fallthru
    _
  // Predicated region
  $region18: #{multi_task_forward.1} parent=0 // pred_check
    _
  $region19: #{multi_task_forward.1} parent=0 // pred_check_branch
    %21 = sbr.rel (0) target = $region21
  $region20: #{multi_task_forward.1} parent=0 // pred_region
    _
  $region21: #{multi_task_forward.1} parent=0 // pred_fallthru
    _
  // Predicated region
  $region22: #{multi_task_forward.1} parent=0 // pred_check
    _
  $region23: #{multi_task_forward.1} parent=0 // pred_check_branch
    %23 = sbr.rel (0) target = $region25
  $region24: #{multi_task_forward.1} parent=0 // pred_region
    _
  $region25: #{multi_task_forward.1} parent=0 // pred_fallthru
    _
  // Predicated region
  $region26: #{multi_task_forward.1} parent=0 // pred_check
    _
  $region27: #{multi_task_forward.1} parent=0 // pred_check_branch
    %25 = sbr.rel (0) target = $region29
  $region28: #{multi_task_forward.1} parent=0 // pred_region
    _
  $region29: #{multi_task_forward.1} parent=0 // pred_fallthru
    _
  %v27 = vld [vmem:[%s1] sm:$0xff]
  %v28 = vld [vmem:[%s1 + $0x8] sm:$0xff]
  %v29 = vld [vmem:[%s1 + $0x10] sm:$0xff]
  %v30 = vld [vmem:[%s1 + $0x18] sm:$0xff]
  %v31 = vld [vmem:[%s1 + $0x20] sm:$0xff]
  %v32 = vld [vmem:[%s1 + $0x28] sm:$0xff]
  %v33 = vld [vmem:[%s1 + $0x30] sm:$0xff]
  %v34 = vld [vmem:[%s1 + $0x38] sm:$0xff]
  %v35 = vld [vmem:[%s0] sm:$0xff]
  %v36 = vld [vmem:[%s0 + $0x8] sm:$0xff]
  %v37 = vld [vmem:[%s0 + $0x10] sm:$0xff]
  %v38 = vld [vmem:[%s0 + $0x18] sm:$0xff]
  %v39 = vld [vmem:[%s0 + $0x20] sm:$0xff]
  %v40 = vld [vmem:[%s0 + $0x28] sm:$0xff]
  %v41 = vld [vmem:[%s0 + $0x30] sm:$0xff]
  %v42 = vld [vmem:[%s0 + $0x38] sm:$0xff]
  %v43 = vld [vmem:[%s0 + $0x40] sm:$0xff]
  %v44 = vld [vmem:[%s0 + $0x48] sm:$0xff]
  %v45 = vld [vmem:[%s0 + $0x50] sm:$0xff]
  %v46 = vld [vmem:[%s0 + $0x58] sm:$0xff]
  %v47 = vld [vmem:[%s0 + $0x60] sm:$0xff]
  %v48 = vld [vmem:[%s0 + $0x68] sm:$0xff]
  %v49 = vld [vmem:[%s0 + $0x70] sm:$0xff]
  %v50 = vld [vmem:[%s0 + $0x78] sm:$0xff]
  %v51 = vld [vmem:[%s2] sm:$0xff]
  %v52 = vld [vmem:[%s2 + $0x8] sm:$0xff]
  %v53 = vld [vmem:[%s2 + $0x10] sm:$0xff]
  %v54 = vld [vmem:[%s2 + $0x18] sm:$0xff]
  %v55 = vld [vmem:[%s2 + $0x20] sm:$0xff]
  %v56 = vld [vmem:[%s2 + $0x28] sm:$0xff]
  %v57 = vld [vmem:[%s2 + $0x30] sm:$0xff]
  %v58 = vld [vmem:[%s2 + $0x38] sm:$0xff]
  %60 = vset.pattern.permute.xlu0 0
  %61 = vperm.xlu0 %60, %v51
  %v62 = vpop.permute.xlu0 %61
  %65 = vset.pattern.permute.xlu0 0
  %66 = vperm.xlu0 %65, %v52
  %v67 = vpop.permute.xlu0 %66
  %70 = vset.pattern.permute.xlu0 0
  %71 = vperm.xlu0 %70, %v53
  %v72 = vpop.permute.xlu0 %71
  %75 = vset.pattern.permute.xlu0 0
  %76 = vperm.xlu0 %75, %v54
  %v77 = vpop.permute.xlu0 %76
  %80 = vset.pattern.permute.xlu0 0
  %81 = vperm.xlu0 %80, %v55
  %v82 = vpop.permute.xlu0 %81
  %85 = vset.pattern.permute.xlu0 0
  %86 = vperm.xlu0 %85, %v56
  %v87 = vpop.permute.xlu0 %86
  %90 = vset.pattern.permute.xlu0 0
  %91 = vperm.xlu0 %90, %v57
  %v92 = vpop.permute.xlu0 %91
  %95 = vset.pattern.permute.xlu0 0
  %96 = vperm.xlu0 %95, %v58
  %v97 = vpop.permute.xlu0 %96
  %vm99 = vcmask 130048
  %v101 = vsel %vm99, %v27, 0
  %v104 = vsel %vm99, %v28, 0
  %v107 = vsel %vm99, %v29, 0
  %v110 = vsel %vm99, %v30, 0
  %v113 = vsel %vm99, %v31, 0
  %v116 = vsel %vm99, %v32, 0
  %v119 = vsel %vm99, %v33, 0
  %v122 = vsel %vm99, %v34, 0
  %v125 = vsel %vm99, %v35, 0
  %v128 = vsel %vm99, %v36, 0
  %v131 = vsel %vm99, %v37, 0
  %v134 = vsel %vm99, %v38, 0
  %v137 = vsel %vm99, %v39, 0
  %v140 = vsel %vm99, %v40, 0
  %v143 = vsel %vm99, %v41, 0
  %v146 = vsel %vm99, %v42, 0
  %v149 = vsel %vm99, %v43, 0
  %v152 = vsel %vm99, %v44, 0
  %v155 = vsel %vm99, %v45, 0
  %v158 = vsel %vm99, %v46, 0
  %v161 = vsel %vm99, %v47, 0
  %v164 = vsel %vm99, %v48, 0
  %v167 = vsel %vm99, %v49, 0
  %v170 = vsel %vm99, %v50, 0
  %172 = vmatprep.subr.mxu0 0.0
  %173 = vmatpush1.xpose.msra.mxu0 %v170
  %174 = vmatprep.subr.mxu0 0.0
  %175 = vmatpush1.xpose.msra.mxu0 %v167
  %176 = vmatprep.subr.mxu0 0.0
  %177 = vmatpush1.xpose.msra.mxu0 %v164
  %178 = vmatprep.subr.mxu0 0.0
  %179 = vmatpush1.xpose.msra.mxu0 %v161
  %180 = vmatprep.subr.mxu0 0.0
  %181 = vmatpush1.xpose.msra.mxu0 %v158
  %182 = vmatprep.subr.mxu0 0.0
  %183 = vmatpush1.xpose.msra.mxu0 %v155
  %184 = vmatprep.subr.mxu0 0.0
  %185 = vmatpush1.xpose.msra.mxu0 %v152
  %186 = vmatprep.subr.mxu0 0.0
  %187 = vmatpush1.xpose.msra.mxu0 %v149
  %188 = vmatprep.subr.mxu0 0.0
  %189 = vmatpush1.xpose.msra.mxu0 %v146
  %190 = vmatprep.subr.mxu0 0.0
  %191 = vmatpush1.xpose.msra.mxu0 %v143
  %192 = vmatprep.subr.mxu0 0.0
  %193 = vmatpush1.xpose.msra.mxu0 %v140
  %194 = vmatprep.subr.mxu0 0.0
  %195 = vmatpush1.xpose.msra.mxu0 %v137
  %196 = vmatprep.subr.mxu0 0.0
  %197 = vmatpush1.xpose.msra.mxu0 %v134
  %198 = vmatprep.subr.mxu0 0.0
  %199 = vmatpush1.xpose.msra.mxu0 %v131
  %200 = vmatprep.subr.mxu0 0.0
  %201 = vmatpush1.xpose.msra.mxu0 %v128
  %202 = vmatprep.subr.mxu0 0.0
  %203 = vmatpush1.xpose.msra.mxu0 %v125
  %204 = vmatprep.subr.mxu0 0.0
  %205 = vmatpush2.xpose.msra.mxu0 0.0
  %206 = vmatprep.subr.mxu0 0.0
  %207 = vmatpush2.xpose.msra.mxu0 0.0
  %208 = vmatprep.subr.mxu0 0.0
  %209 = vmatpush2.xpose.msra.mxu0 0.0
  %210 = vmatprep.subr.mxu0 0.0
  %211 = vmatpush2.xpose.msra.mxu0 0.0
  %212 = vmatprep.subr.mxu0 0.0
  %213 = vmatpush2.xpose.msra.mxu0 0.0
  %214 = vmatprep.subr.mxu0 0.0
  %215 = vmatpush2.xpose.msra.mxu0 0.0
  %216 = vmatprep.subr.mxu0 0.0
  %217 = vmatpush2.xpose.msra.mxu0 0.0
  %218 = vmatprep.subr.mxu0 0.0
  %219 = vmatpush2.xpose.msra.mxu0 0.0
  %220 = vmatprep.subr.mxu0 0.0
  %221 = vmatpush2.xpose.msra.mxu0 0.0
  %222 = vmatprep.subr.mxu0 0.0
  %223 = vmatpush2.xpose.msra.mxu0 0.0
  %224 = vmatprep.subr.mxu0 0.0
  %225 = vmatpush2.xpose.msra.mxu0 0.0
  %226 = vmatprep.subr.mxu0 0.0
  %227 = vmatpush2.xpose.msra.mxu0 0.0
  %228 = vmatprep.subr.mxu0 0.0
  %229 = vmatpush2.xpose.msra.mxu0 0.0
  %230 = vmatprep.subr.mxu0 0.0
  %231 = vmatpush2.xpose.msra.mxu0 0.0
  %232 = vmatprep.subr.mxu0 0.0
  %233 = vmatpush2.xpose.msra.mxu0 0.0
  %234 = vmatprep.subr.mxu0 0.0
  %235 = vmatpush2.xpose.msra.mxu0 0.0
  %236 = vmatprep.mubr.f32.mxu0 0.0
  %237 = vmatmul.mubr.f32.gmra.mxu0 %v101
  %v238 = vpop.f32.mrf.mxu0
  %v239 = vadd.f32 %v62, %v238
  %v240 = vpop.f32.mrf.mxu0
  %241 = vmatprep.mubr.f32.mxu0 0.0
  %242 = vmatmul.mubr.f32.gmra.mxu0 %v104
  %v243 = vpop.f32.mrf.mxu0
  %v244 = vadd.f32 %v67, %v243
  %v245 = vpop.f32.mrf.mxu0
  %246 = vmatprep.mubr.f32.mxu0 0.0
  %247 = vmatmul.mubr.f32.gmra.mxu0 %v107
  %v248 = vpop.f32.mrf.mxu0
  %v249 = vadd.f32 %v72, %v248
  %v250 = vpop.f32.mrf.mxu0
  %251 = vmatprep.mubr.f32.mxu0 0.0
  %252 = vmatmul.mubr.f32.gmra.mxu0 %v110
  %v253 = vpop.f32.mrf.mxu0
  %v254 = vadd.f32 %v77, %v253
  %v255 = vpop.f32.mrf.mxu0
  %256 = vmatprep.mubr.f32.mxu0 0.0
  %257 = vmatmul.mubr.f32.gmra.mxu0 %v113
  %v258 = vpop.f32.mrf.mxu0
  %v259 = vadd.f32 %v82, %v258
  %v260 = vpop.f32.mrf.mxu0
  %261 = vmatprep.mubr.f32.mxu0 0.0
  %262 = vmatmul.mubr.f32.gmra.mxu0 %v116
  %v263 = vpop.f32.mrf.mxu0
  %v264 = vadd.f32 %v87, %v263
  %v265 = vpop.f32.mrf.mxu0
  %266 = vmatprep.mubr.f32.mxu0 0.0
  %267 = vmatmul.mubr.f32.gmra.mxu0 %v119
  %v268 = vpop.f32.mrf.mxu0
  %v269 = vadd.f32 %v92, %v268
  %v270 = vpop.f32.mrf.mxu0
  %271 = vmatprep.mubr.f32.mxu0 0.0
  %272 = vmatmul.mubr.f32.gmra.mxu0 %v122
  %v273 = vpop.f32.mrf.mxu0
  %v274 = vadd.f32 %v97, %v273
  %v275 = vpop.f32.mrf.mxu0
  %276 = vdwg.mxu0
  %v277 = vmax.f32 %v239, 0.0
  %v278 = vmax.f32 %v244, 0.0
  %v279 = vmax.f32 %v249, 0.0
  %v280 = vmax.f32 %v254, 0.0
  %v281 = vmax.f32 %v259, 0.0
  %v282 = vmax.f32 %v264, 0.0
  %v283 = vmax.f32 %v269, 0.0
  %v284 = vmax.f32 %v274, 0.0
  %v285 = vpack.c.bf16 %v278, %v277
  %v286 = vpack.c.bf16 %v280, %v279
  %v287 = vpack.c.bf16 %v282, %v281
  %v288 = vpack.c.bf16 %v284, %v283
  %v289 = vld [vmem:[%s3] sm:$0xf]
  %v290 = vld [vmem:[%s3 + $0x4] sm:$0xf]
  %v291 = vld [vmem:[%s3 + $0x8] sm:$0xf]
  %v292 = vld [vmem:[%s3 + $0xc] sm:$0xf]
  %v293 = vld [vmem:[%s4] sm:$0xff]
  %v294 = vld [vmem:[%s4 + $0x8] sm:$0xff]
  %v295 = vld [vmem:[%s4 + $0x10] sm:$0xff]
  %v296 = vld [vmem:[%s4 + $0x18] sm:$0xff]
  %298 = vset.pattern.permute.xlu0 0
  %299 = vperm.xlu0 %298, %v293
  %v300 = vpop.permute.xlu0 %299
  %303 = vset.pattern.permute.xlu0 0
  %304 = vperm.xlu0 %303, %v294
  %v305 = vpop.permute.xlu0 %304
  %308 = vset.pattern.permute.xlu0 0
  %309 = vperm.xlu0 %308, %v295
  %v310 = vpop.permute.xlu0 %309
  %313 = vset.pattern.permute.xlu0 0
  %314 = vperm.xlu0 %313, %v296
  %v315 = vpop.permute.xlu0 %314
  %v321 = vunpack.c.l.b16 %v289
  %v322 = vunpack.c.l.b16 %v290
  %v323 = vunpack.c.l.b16 %v291
  %v324 = vunpack.c.l.b16 %v292
  %v325 = vpack.c.b16 %v322, %v321
  %v326 = vpack.c.b16 %v324, %v323
  %vm327 = vcmask 523264
  %v329 = vsel %vm327, %v325, 0
  %v332 = vsel %vm327, %v326, 0
  %334 = vmatprep.subr.bf16.mxu0 0
  %335 = vmatpush1.bf16.msra.mxu0 0
  %336 = vmatprep.subr.bf16.mxu0 0
  %337 = vmatpush1.bf16.msra.mxu0 0
  %338 = vmatprep.subr.bf16.mxu0 0
  %339 = vmatpush1.bf16.msra.mxu0 0
  %340 = vmatprep.subr.bf16.mxu0 0
  %341 = vmatpush1.bf16.msra.mxu0 0
  %342 = vmatprep.subr.bf16.mxu0 0
  %343 = vmatpush1.bf16.msra.mxu0 %v288
  %344 = vmatprep.subr.bf16.mxu0 0
  %345 = vmatpush1.bf16.msra.mxu0 %v287
  %346 = vmatprep.subr.bf16.mxu0 0
  %347 = vmatpush1.bf16.msra.mxu0 %v286
  %348 = vmatprep.subr.bf16.mxu0 0
  %349 = vmatpush1.bf16.msra.mxu0 %v285
  %350 = vmatprep.subr.bf16.mxu0 0
  %351 = vmatpush2.bf16.msra.mxu0 0
  %352 = vmatprep.subr.bf16.mxu0 0
  %353 = vmatpush2.bf16.msra.mxu0 0
  %354 = vmatprep.subr.bf16.mxu0 0
  %355 = vmatpush2.bf16.msra.mxu0 0
  %356 = vmatprep.subr.bf16.mxu0 0
  %357 = vmatpush2.bf16.msra.mxu0 0
  %358 = vmatprep.subr.bf16.mxu0 0
  %359 = vmatpush2.bf16.msra.mxu0 0
  %360 = vmatprep.subr.bf16.mxu0 0
  %361 = vmatpush2.bf16.msra.mxu0 0
  %362 = vmatprep.subr.bf16.mxu0 0
  %363 = vmatpush2.bf16.msra.mxu0 0
  %364 = vmatprep.subr.bf16.mxu0 0
  %365 = vmatpush2.bf16.msra.mxu0 0
  %366 = vmatprep.mubr.bf16.mxu0 0
  %367 = vmatmul.mubr.bf16.gmra.mxu0 %v329
  %v368 = vpop.f32.mrf.mxu0
  %v369 = vadd.f32 %v300, %v368
  %v370 = vpop.f32.mrf.mxu0
  %v371 = vpop.f32.mrf.mxu0
  %v372 = vadd.f32 %v305, %v371
  %v373 = vpop.f32.mrf.mxu0
  %374 = vmatprep.mubr.bf16.mxu0 0
  %375 = vmatmul.mubr.bf16.gmra.mxu0 %v332
  %v376 = vpop.f32.mrf.mxu0
  %v377 = vadd.f32 %v310, %v376
  %v378 = vpop.f32.mrf.mxu0
  %v379 = vpop.f32.mrf.mxu0
  %v380 = vadd.f32 %v315, %v379
  %v381 = vpop.f32.mrf.mxu0
  %382 = vdwg.mxu0
  %v383 = vmax.f32 %v369, 0.0
  %v384 = vmax.f32 %v372, 0.0
  %v385 = vmax.f32 %v377, 0.0
  %v386 = vmax.f32 %v380, 0.0
  %v387 = vpack.c.bf16 %v384, %v383
  %v388 = vpack.c.bf16 %v386, %v385
  %v389 = vld [vmem:[%s5] sm:$0xf]
  %v390 = vld [vmem:[%s5 + $0x4] sm:$0xf]
  %v391 = vld [vmem:[%s5 + $0x8] sm:$0xf]
  %v392 = vld [vmem:[%s6] sm:$0xff]
  %v393 = vld [vmem:[%s6 + $0x8] sm:$0xff]
  %v394 = vld [vmem:[%s6 + $0x10] sm:$0xff]
  %396 = vset.pattern.permute.xlu0 0
  %397 = vperm.xlu0 %396, %v392
  %v398 = vpop.permute.xlu0 %397
  %401 = vset.pattern.permute.xlu0 0
  %402 = vperm.xlu0 %401, %v393
  %v403 = vpop.permute.xlu0 %402
  %406 = vset.pattern.permute.xlu0 0
  %407 = vperm.xlu0 %406, %v394
  %v408 = vpop.permute.xlu0 %407
  %v413 = vunpack.c.l.b16 %v389
  %v414 = vunpack.c.l.b16 %v390
  %v415 = vunpack.c.l.b16 %v391
  %v416 = vpack.c.b16 %v414, %v413
  %v417 = vpack.c.b16 %v415, %v415
  %vm418 = vcmask 261120
  %v420 = vsel %vm418, %v416, 0
  %v423 = vsel %vm418, %v417, 0
  %425 = vmatprep.subr.bf16.mxu0 0
  %426 = vmatpush1.bf16.msra.mxu0 0
  %427 = vmatprep.subr.bf16.mxu0 0
  %428 = vmatpush1.bf16.msra.mxu0 0
  %429 = vmatprep.subr.bf16.mxu0 0
  %430 = vmatpush1.bf16.msra.mxu0 0
  %431 = vmatprep.subr.bf16.mxu0 0
  %432 = vmatpush1.bf16.msra.mxu0 0
  %433 = vmatprep.subr.bf16.mxu0 0
  %434 = vmatpush1.bf16.msra.mxu0 0
  %435 = vmatprep.subr.bf16.mxu0 0
  %436 = vmatpush1.bf16.msra.mxu0 0
  %437 = vmatprep.subr.bf16.mxu0 0
  %438 = vmatpush1.bf16.msra.mxu0 %v388
  %439 = vmatprep.subr.bf16.mxu0 0
  %440 = vmatpush1.bf16.msra.mxu0 %v387
  %441 = vmatprep.subr.bf16.mxu0 0
  %442 = vmatpush2.bf16.msra.mxu0 0
  %443 = vmatprep.subr.bf16.mxu0 0
  %444 = vmatpush2.bf16.msra.mxu0 0
  %445 = vmatprep.subr.bf16.mxu0 0
  %446 = vmatpush2.bf16.msra.mxu0 0
  %447 = vmatprep.subr.bf16.mxu0 0
  %448 = vmatpush2.bf16.msra.mxu0 0
  %449 = vmatprep.subr.bf16.mxu0 0
  %450 = vmatpush2.bf16.msra.mxu0 0
  %451 = vmatprep.subr.bf16.mxu0 0
  %452 = vmatpush2.bf16.msra.mxu0 0
  %453 = vmatprep.subr.bf16.mxu0 0
  %454 = vmatpush2.bf16.msra.mxu0 0
  %455 = vmatprep.subr.bf16.mxu0 0
  %456 = vmatpush2.bf16.msra.mxu0 0
  %457 = vmatprep.mubr.bf16.mxu0 0
  %458 = vmatmul.mubr.bf16.gmra.mxu0 %v420
  %v459 = vpop.f32.mrf.mxu0
  %v460 = vadd.f32 %v398, %v459
  %v461 = vpop.f32.mrf.mxu0
  %v462 = vpop.f32.mrf.mxu0
  %v463 = vadd.f32 %v403, %v462
  %v464 = vpop.f32.mrf.mxu0
  %465 = vmatprep.mubr.bf16.mxu0 0
  %466 = vmatmul.mubr.bf16.gmra.mxu0 %v423
  %v467 = vpop.f32.mrf.mxu0
  %v468 = vadd.f32 %v408, %v467
  %v469 = vpop.f32.mrf.mxu0
  %v470 = vpop.f32.mrf.mxu0
  %v471 = vpop.f32.mrf.mxu0
  %472 = vdwg.mxu0
  %473 = vst [vmem:[%s7] sm:$0xff] %v460
  %474 = vst [vmem:[%s7 + $0x8] sm:$0xff] %v463
  %475 = vst [vmem:[%s7 + $0x10] sm:$0xff] %v468
  // Predicated region
  $region30: #{multi_task_forward.1} parent=0 // pred_check
    _
  $region31: #{multi_task_forward.1} parent=0 // pred_check_branch
    %477 = sbr.rel (0) target = $region33
  $region32: #{multi_task_forward.1} parent=0 // pred_region
    _
  $region33: #{multi_task_forward.1} parent=0 // pred_fallthru
    _
  // Predicated region
  $region34: #{multi_task_forward.1} parent=0 // pred_check
    _
  $region35: #{multi_task_forward.1} parent=0 // pred_check_branch
    %479 = sbr.rel (0) target = $region37
  $region36: #{multi_task_forward.1} parent=0 // pred_region
    _
  $region37: #{multi_task_forward.1} parent=0 // pred_fallthru
    _

</llo_original>
